<compile_context>
chip_gen: v6e
topology: v6e:2x2x1
jax: 0.10.0
libtpu: 0.0.40
codegen_flags: <defaults>
</compile_context>

<pallas_src>
import functools

import jax
import jax.numpy as jnp
from jax.experimental import pallas as pl
from jax.experimental.pallas import tpu as pltpu


def _round_up(x, m):
    return ((x + m - 1) // m) * m


def _ce_kernel(x_ref, t_ref, o_ref, *, hw, tp, needs_mask):
    """x_ref: (1, C, TP) logits; t_ref: (1, 1, TP) int32; o_ref: (1, 1, 8, 128) f32."""
    x = x_ref[0].astype(jnp.float32)                 # (C, TP) classes on sublanes
    t = t_ref[0]                                     # (1, TP) int32

    # Numerically-stable log-softmax pieces along the (short) class/sublane axis.
    m = jnp.max(x, axis=0, keepdims=True)            # (1, TP)
    xc = x - m                                       # (C, TP)
    s = jnp.sum(jnp.exp(xc), axis=0, keepdims=True)  # (1, TP)

    # Centered logit at the target class via a sublane class-iota select.
    classes = jax.lax.broadcasted_iota(jnp.int32, x.shape, 0)     # (C, TP)
    x_t = jnp.sum(jnp.where(classes == t, xc, 0.0),
                  axis=0, keepdims=True)                          # (1, TP)

    # per-pixel NLL = logsumexp(x) - x[target] = log(s) - (x[target] - m)
    nll = jnp.log(s) - x_t                                        # (1, TP)

    # Interior tiles: plain cross-lane reduce, no masking work at all.
    o_ref[...] = jnp.full(o_ref.shape, jnp.sum(nll), dtype=jnp.float32)

    if needs_mask:
        p = pl.program_id(1)

        @pl.when(p == pl.num_programs(1) - 1)
        def _():
            # Only the ragged last tile pays for the lane mask.  All reductions
            # above are per-pixel-column, so garbage in the overhang columns
            # never contaminates valid columns; zero them here before the sum.
            lane = jax.lax.broadcasted_iota(jnp.int32, nll.shape, 1)
            valid = (p * tp + lane) < hw
            o_ref[...] = jnp.full(o_ref.shape,
                                  jnp.sum(jnp.where(valid, nll, 0.0)),
                                  dtype=jnp.float32)


def _launch(x3, t3, hw):
    """x3: (Neff, C, HWeff) logits (any float dtype); t3: (Neff, 1, HWeff) int32."""
    n_eff, C, hw_eff = x3.shape
    assert hw_eff == hw

    try:
        vmem_cap = int(pltpu.get_tpu_info().vmem_capacity_bytes)
    except Exception:
        vmem_cap = 64 * 1024 * 1024

    in_itemsize = jnp.dtype(x3.dtype).itemsize
    # Sublane padding of the class axis: 8 rows per 32-bit, packed for narrow dtypes.
    c_pad_in = _round_up(C, 8 * max(1, 4 // in_itemsize))
    c_pad_f32 = _round_up(C, 8)

    # Per-pixel-column VMEM bytes: double-buffered logits + double-buffered int32
    # targets + ~5 live f32 (C, TP) temporaries (upcast x, xc, exp(xc), class
    # iota, one-hot select result).
    per_col = (2 * c_pad_in * in_itemsize) + (2 * 8 * 4) + (5 * c_pad_f32 * 4)

    # Size the pixel tile by per-step HBM traffic (~4 MB >> 0.35 us step
    # overhead at any generation's bandwidth), then clamp to the VMEM budget.
    hbm_per_px = C * in_itemsize + 4
    tp_hbm = (4 * 1024 * 1024) // hbm_per_px
    tp_vmem = (vmem_cap // 3) // per_col
    hw_pad = _round_up(hw, 128)
    tp = min(tp_hbm, tp_vmem, hw_pad)
    tp = max(128, (tp // 128) * 128)

    n_p = pl.cdiv(hw, tp)
    needs_mask = (hw % tp) != 0

    vmem_limit = int(min(vmem_cap * 3 // 4, 112 * 1024 * 1024))

    partial = pl.pallas_call(
        functools.partial(_ce_kernel, hw=hw, tp=tp, needs_mask=needs_mask),
        out_shape=jax.ShapeDtypeStruct((n_eff, n_p, 8, 128), jnp.float32),
        grid_spec=pltpu.PrefetchScalarGridSpec(
            num_scalar_prefetch=0,
            grid=(n_eff, n_p),
            in_specs=[
                pl.BlockSpec((1, C, tp), lambda n, p: (n, 0, p)),
                pl.BlockSpec((1, 1, tp), lambda n, p: (n, 0, p)),
            ],
            out_specs=pl.BlockSpec((1, 1, 8, 128), lambda n, p: (n, p, 0, 0)),
        ),
        compiler_params=pltpu.CompilerParams(
            dimension_semantics=("parallel", "parallel"),
            vmem_limit_bytes=vmem_limit,
        ),
    )(x3, t3)

    return jnp.sum(partial[:, :, 0, 0])


def cross_entropy_loss(logits, target):
    """logits: (N, C, H, W) float; target: (N, H, W) int -> scalar f32 mean loss."""
    N, C, H, W = logits.shape
    HW = H * W

    # Keep logits in their incoming dtype (bf16 stays bf16 through the DMA);
    # the kernel upcasts to f32 before exp/log.
    t = target.astype(jnp.int32)

    # NOTE: targets are assumed to be in [0, C) (matches the stated contract);
    # out-of-range values would silently yield a finite-but-wrong loss.
    if HW < 1024 and N > 1:
        # Small spatial dims: fold the batch axis into the lane axis so lane
        # occupancy does not collapse (costs one small transpose on tiny data).
        x3 = jnp.transpose(logits.reshape(N, C, HW), (1, 0, 2)).reshape(1, C, N * HW)
        t3 = t.reshape(1, 1, N * HW)
        total = _launch(x3, t3, N * HW)
    else:
        x3 = logits.reshape(N, C, HW)
        t3 = t.reshape(N, 1, HW)
        total = _launch(x3, t3, HW)

    return total / float(N * HW)


def _cross_entropy_ref(logits, target):
    """Pure-JAX reference matching torch F.cross_entropy (mean reduction)."""
    x = logits.astype(jnp.float32)
    lse = jax.scipy.special.logsumexp(x, axis=1)                          # (N, H, W)
    x_t = jnp.take_along_axis(x, target[:, None].astype(jnp.int32), axis=1)[:, 0]
    return jnp.mean(lse - x_t)


if __name__ == "__main__":
    key = jax.random.PRNGKey(0)
    k1, k2, k3, k4 = jax.random.split(key, 4)

    # Primary example (shapes implied by the module usage): small-HW path.
    N, C, H, W = 2, 4, 16, 16
    logits = jax.random.normal(k1, (N, C, H, W), dtype=jnp.float32)
    target = jax.random.randint(k2, (N, H, W), 0, C, dtype=jnp.int32)

    loss = jax.block_until_ready(cross_entropy_loss(logits, target))
    ref = jax.block_until_ready(_cross_entropy_ref(logits, target))
    assert jnp.allclose(loss, ref, atol=1e-5, rtol=1e-5), (loss, ref)

    # Secondary sanity check exercising the main (large-HW, per-sample) path.
    N2, C2, H2, W2 = 1, 4, 40, 40
    logits2 = jax.random.normal(k3, (N2, C2, H2, W2), dtype=jnp.float32)
    target2 = jax.random.randint(k4, (N2, H2, W2), 0, C2, dtype=jnp.int32)
    loss2 = jax.block_until_ready(cross_entropy_loss(logits2, target2))
    ref2 = jax.block_until_ready(_cross_entropy_ref(logits2, target2))
    assert jnp.allclose(loss2, ref2, atol=1e-5, rtol=1e-5), (loss2, ref2)

    print("KERNEL_OK")
</pallas_src>

<mosaic_0001>
module attributes {stable_mosaic.version = 11 : i64} {
  func.func @_ce_kernel(%arg0: i32, %arg1: i32, %arg2: memref<1x4x512xf32, #tpu.memory_space<vmem>>, %arg3: memref<1x1x512xi32, #tpu.memory_space<vmem>>, %arg4: memref<1x1x8x128xf32, #tpu.memory_space<vmem>>) attributes {dimension_semantics = [#tpu.dimension_semantics<parallel>, #tpu.dimension_semantics<parallel>], iteration_bounds = array<i64: 1, 1>, scalar_prefetch = 0 : i64, scratch_operands = 0 : i64, tpu.core_type = #tpu.core_type<tc>, window_params = [{transform_indices = @transform_0, window_bounds = array<i64: 1, 4, 512>}, {transform_indices = @transform_1, window_bounds = array<i64: 1, 1, 512>}, {transform_indices = @transform_2, window_bounds = array<i64: 1, 1, 8, 128>}]} {
    %c0 = arith.constant 0 : index
    %c0_0 = arith.constant 0 : index
    %c0_1 = arith.constant 0 : index
    %0 = vector.load %arg2[%c0, %c0_0, %c0_1] : memref<1x4x512xf32, #tpu.memory_space<vmem>>, vector<1x4x512xf32>
    %1 = vector.shape_cast %0 : vector<1x4x512xf32> to vector<4x512xf32>
    %c0_2 = arith.constant 0 : index
    %c0_3 = arith.constant 0 : index
    %c0_4 = arith.constant 0 : index
    %2 = vector.load %arg3[%c0_2, %c0_3, %c0_4] : memref<1x1x512xi32, #tpu.memory_space<vmem>>, vector<1x1x512xi32>
    %3 = vector.shape_cast %2 : vector<1x1x512xi32> to vector<1x512xi32>
    %cst = arith.constant dense<0xFF800000> : vector<512xf32>
    %4 = vector.multi_reduction <maximumf>, %1, %cst [0] : vector<4x512xf32> to vector<512xf32>
    %5 = vector.shape_cast %4 : vector<512xf32> to vector<1x512xf32>
    %6 = vector.broadcast %5 : vector<1x512xf32> to vector<4x512xf32>
    %7 = arith.subf %1, %6 : vector<4x512xf32>
    %8 = math.exp %7 : vector<4x512xf32>
    %cst_5 = arith.constant dense<0.000000e+00> : vector<512xf32>
    %9 = vector.multi_reduction <add>, %8, %cst_5 [0] : vector<4x512xf32> to vector<512xf32>
    %10 = vector.shape_cast %9 : vector<512xf32> to vector<1x512xf32>
    %11 = tpu.iota {dimensions = array<i32: 0>} : vector<4x512xi32>
    %12 = vector.broadcast %3 : vector<1x512xi32> to vector<4x512xi32>
    %13 = arith.cmpi eq, %11, %12 : vector<4x512xi32>
    %cst_6 = arith.constant 0.000000e+00 : f32
    %14 = vector.broadcast %cst_6 : f32 to vector<4x512xf32>
    %15 = arith.select %13, %7, %14 : vector<4x512xi1>, vector<4x512xf32>
    %cst_7 = arith.constant dense<0.000000e+00> : vector<512xf32>
    %16 = vector.multi_reduction <add>, %15, %cst_7 [0] : vector<4x512xf32> to vector<512xf32>
    %17 = vector.shape_cast %16 : vector<512xf32> to vector<1x512xf32>
    %18 = math.log %10 : vector<1x512xf32>
    %19 = arith.subf %18, %17 : vector<1x512xf32>
    %20 = vector.shape_cast %19 : vector<1x512xf32> to vector<1x1x512xf32>
    %cst_8 = arith.constant dense<0.000000e+00> : vector<1xf32>
    %21 = vector.multi_reduction <add>, %20, %cst_8 [1, 2] : vector<1x1x512xf32> to vector<1xf32>
    %22 = vector.shape_cast %21 : vector<1xf32> to vector<1x1x1xf32>
    %23 = vector.extract %22[0, 0, 0] : f32 from vector<1x1x1xf32>
    %24 = vector.broadcast %23 : f32 to vector<1x1x8x128xf32>
    %c0_9 = arith.constant 0 : index
    %c0_10 = arith.constant 0 : index
    %c0_11 = arith.constant 0 : index
    %c0_12 = arith.constant 0 : index
    %25 = vector.load %arg4[%c0_9, %c0_10, %c0_11, %c0_12] : memref<1x1x8x128xf32, #tpu.memory_space<vmem>>, vector<1x1x8x128xf32>
    tpu.vector_store %arg4[%c0_9, %c0_10, %c0_11, %c0_12], %24 {strides = array<i32>} : memref<1x1x8x128xf32, #tpu.memory_space<vmem>>, vector<1x1x8x128xf32>,
    return
  }
  func.func @transform_0(%arg0: i32, %arg1: i32) -> (i32, i32, i32) {
    %c0_i32 = arith.constant 0 : i32
    %c0_i32_0 = arith.constant 0 : i32
    return %arg0, %c0_i32, %arg1 : i32, i32, i32
  }
  func.func @transform_1(%arg0: i32, %arg1: i32) -> (i32, i32, i32) {
    %c0_i32 = arith.constant 0 : i32
    %c0_i32_0 = arith.constant 0 : i32
    return %arg0, %c0_i32, %arg1 : i32, i32, i32
  }
  func.func @transform_2(%arg0: i32, %arg1: i32) -> (i32, i32, i32, i32) {
    %c0_i32 = arith.constant 0 : i32
    %c0_i32_0 = arith.constant 0 : i32
    %c0_i32_1 = arith.constant 0 : i32
    return %arg0, %arg1, %c0_i32, %c0_i32_0 : i32, i32, i32, i32
  }
}

</mosaic_0001>

<llo_original>
// kernel: tpu_custom_call.1
$region0: #{tpu_custom_call.1}
  #allocation0 [shape = 'u32[]', space=smem, size = 0x4, offset = 0x4, fixed_abs, tag = 'smem constant byte address 0x4 - core index']
  #allocation1 [shape = 'u32[144,128]{1,0:T(1,128)}', space=vmem, size = 0x12000, scoped, tag = 'internal scratch']
  %s0 = inlined_call_operand.hbm [shape: f32[1,4,512], index: 0, kind: input, shape index: {}]
  %s1 = inlined_call_operand.hbm [shape: s32[1,1,512], index: 1, kind: input, shape index: {}]
  %s2 = inlined_call_operand.hbm [shape: f32[1,1,8,128], index: 2, kind: output, shape index: {}]
  %s3 = sld [smem:[#allocation0]]
  $region26: #{tpu_custom_call.1} parent=0
    _
  %s5 = ssub.s32 1, %s3
  %s6 = scalar_select 0, %s5, %s3
  $region1: #{tpu_custom_call.1} parent=0
    #allocation2 [shape = 'u8[8192]{0}', space=vmem, size = 0x2000, scoped, tag = 'input window, operand 0, single buffered']
    #allocation3 [shape = 's32[1]{0}', space=sflag, size = 0x4, scoped, tag = 'scoped memory for tpu_custom_call.1']
    #allocation4 [shape = 's32[1]{0}', space=sflag, size = 0x4, scoped, tag = 'scoped memory for tpu_custom_call.1']
    #allocation5 [shape = 'u8[2048]{0}', space=vmem, size = 0x800, scoped, tag = 'input window, operand 1, single buffered']
    #allocation6 [shape = 's32[1]{0}', space=sflag, size = 0x4, scoped, tag = 'scoped memory for tpu_custom_call.1']
    #allocation7 [shape = 'u8[4096]{0}', space=vmem, size = 0x1000, scoped, tag = 'output window, operand 0, single buffered']
    %7 = vsyncpa [#allocation3], 0
    %8 = vsyncpa [#allocation6], 0
    %9 = vsyncpa [#allocation4], 0
    // Predicated region
    $region2: #{tpu_custom_call.1} parent=1 // pred_check
      _
    $region3: #{tpu_custom_call.1} parent=1 // pred_check_branch
      %11 = sbr.rel (0) target = $region5
    $region4: #{tpu_custom_call.1} parent=1 // pred_region
      %s13 = ssub.s32 256, 256
      %14 = vsyncadd [#allocation3], %s13
      %s16 = sshll.u32 [#allocation2], 4
      %s17 = int_to_ptr.vmem [resolvable:$true] %s16
      %19 = dma.hbm_to_vmem [thread:$0]  %s0, 256, %s17, [#allocation3]
    $region5: #{tpu_custom_call.1} parent=1 // pred_fallthru
      _
    // Predicated region
    $region6: #{tpu_custom_call.1} parent=1 // pred_check
      _
    $region7: #{tpu_custom_call.1} parent=1 // pred_check_branch
      %21 = sbr.rel (0) target = $region9
    $region8: #{tpu_custom_call.1} parent=1 // pred_region
      %s23 = ssub.s32 64, 64
      %24 = vsyncadd [#allocation6], %s23
      %s26 = sshll.u32 [#allocation5], 4
      %s27 = int_to_ptr.vmem [resolvable:$true] %s26
      %29 = dma.hbm_to_vmem [thread:$0]  %s1, 64, %s27, [#allocation6]
    $region9: #{tpu_custom_call.1} parent=1 // pred_fallthru
      _
    // Predicated region
    $region10: #{tpu_custom_call.1} parent=1 // pred_check
      _
    $region11: #{tpu_custom_call.1} parent=1 // pred_check_branch
      %31 = sbr.rel (0) target = $region13
    $region12: #{tpu_custom_call.1} parent=1 // pred_region
      %32 = dma.done [#allocation3], 256
    $region13: #{tpu_custom_call.1} parent=1 // pred_fallthru
      _
    // Predicated region
    $region14: #{tpu_custom_call.1} parent=1 // pred_check
      _
    $region15: #{tpu_custom_call.1} parent=1 // pred_check_branch
      %34 = sbr.rel (0) target = $region17
    $region16: #{tpu_custom_call.1} parent=1 // pred_region
      %35 = dma.done [#allocation6], 64
    $region17: #{tpu_custom_call.1} parent=1 // pred_fallthru
      _
    %v36 = vld [vmem:[#allocation2] sm:$0xff]
    %v37 = vld [vmem:[#allocation2 + $0x8] sm:$0xff]
    %v38 = vld [vmem:[#allocation5] sm:$0xf]
    %v41 = vcombine.high %v36, %v36
    %v42 = vcombine.high %v37, %v37
    %vm45 = vcmask 1043456
    %v46 = vsel %vm45, %v36, -inf
    %v47 = vrot.slane %v46, 4
    %v48 = vmax.f32 %v46, %v47
    %v49 = vrot.slane %v48, 2
    %v50 = vmax.f32 %v48, %v49
    %v51 = vrot.slane %v50, 1
    %v52 = vmax.f32 %v50, %v51
    %v53 = vsel %vm45, %v41, -inf
    %v54 = vrot.slane %v53, 4
    %v55 = vmax.f32 %v53, %v54
    %v56 = vrot.slane %v55, 2
    %v57 = vmax.f32 %v55, %v56
    %v58 = vrot.slane %v57, 1
    %v59 = vmax.f32 %v57, %v58
    %v60 = vsel %vm45, %v37, -inf
    %v61 = vrot.slane %v60, 4
    %v62 = vmax.f32 %v60, %v61
    %v63 = vrot.slane %v62, 2
    %v64 = vmax.f32 %v62, %v63
    %v65 = vrot.slane %v64, 1
    %v66 = vmax.f32 %v64, %v65
    %v67 = vsel %vm45, %v42, -inf
    %v68 = vrot.slane %v67, 4
    %v69 = vmax.f32 %v67, %v68
    %v70 = vrot.slane %v69, 2
    %v71 = vmax.f32 %v69, %v70
    %v72 = vrot.slane %v71, 1
    %v73 = vmax.f32 %v71, %v72
    %v78 = vcombine.low %v52, %v59
    %v79 = vcombine.low %v66, %v73
    %v82 = vsub.f32 %v36, %v78
    %v83 = vsub.f32 %v37, %v79
    %v84 = vmul.f32 %v82, 1.442695
    %v85 = vpow.pop %v84
    %v86 = vmul.f32 %v83, 1.442695
    %v87 = vpow.pop %v86
    %v90 = vcombine.high %v85, %v85
    %v91 = vcombine.high %v87, %v87
    %v94 = vsel %vm45, %v85, 0.0
    %v95 = vrot.slane %v94, 4
    %v96 = vadd.f32 %v94, %v95
    %v97 = vrot.slane %v96, 2
    %v98 = vadd.f32 %v96, %v97
    %v99 = vrot.slane %v98, 1
    %v100 = vadd.f32 %v98, %v99
    %v101 = vsel %vm45, %v90, 0.0
    %v102 = vrot.slane %v101, 4
    %v103 = vadd.f32 %v101, %v102
    %v104 = vrot.slane %v103, 2
    %v105 = vadd.f32 %v103, %v104
    %v106 = vrot.slane %v105, 1
    %v107 = vadd.f32 %v105, %v106
    %v108 = vsel %vm45, %v87, 0.0
    %v109 = vrot.slane %v108, 4
    %v110 = vadd.f32 %v108, %v109
    %v111 = vrot.slane %v110, 2
    %v112 = vadd.f32 %v110, %v111
    %v113 = vrot.slane %v112, 1
    %v114 = vadd.f32 %v112, %v113
    %v115 = vsel %vm45, %v91, 0.0
    %v116 = vrot.slane %v115, 4
    %v117 = vadd.f32 %v115, %v116
    %v118 = vrot.slane %v117, 2
    %v119 = vadd.f32 %v117, %v118
    %v120 = vrot.slane %v119, 1
    %v121 = vadd.f32 %v119, %v120
    %v122 = vlaneseq
    %v123 = vshrl.u32 %v122, 7
    %v124 = vlaneseq
    %v125 = vshrl.u32 %v124, 7
    %v126 = vsub.s32 0, %v125
    %v127 = vrot.slane %v38, %v126
    %v128 = vlaneseq
    %v129 = vshrl.u32 %v128, 7
    %v130 = vsub.s32 1, %v129
    %v131 = vrot.slane %v38, %v130
    %v132 = vlaneseq
    %v133 = vshrl.u32 %v132, 7
    %v134 = vsub.s32 2, %v133
    %v135 = vrot.slane %v38, %v134
    %v136 = vlaneseq
    %v137 = vshrl.u32 %v136, 7
    %v138 = vsub.s32 3, %v137
    %v139 = vrot.slane %v38, %v138
    %vm140 = vcmp.eq.s32.totalorder %v123, %v127
    %vm141 = vcmp.eq.s32.totalorder %v123, %v131
    %vm142 = vcmp.eq.s32.totalorder %v123, %v135
    %vm143 = vcmp.eq.s32.totalorder %v123, %v139
    %v146 = vcombine.high %v82, %v82
    %v147 = vcombine.high %v83, %v83
    %v150 = vsel %vm140, %v82, 0.0
    %v151 = vsel %vm141, %v146, 0.0
    %v152 = vsel %vm142, %v83, 0.0
    %v153 = vsel %vm143, %v147, 0.0
    %v154 = vsel %vm45, %v150, 0.0
    %v155 = vrot.slane %v154, 4
    %v156 = vadd.f32 %v154, %v155
    %v157 = vrot.slane %v156, 2
    %v158 = vadd.f32 %v156, %v157
    %v159 = vrot.slane %v158, 1
    %v160 = vadd.f32 %v158, %v159
    %v161 = vsel %vm45, %v151, 0.0
    %v162 = vrot.slane %v161, 4
    %v163 = vadd.f32 %v161, %v162
    %v164 = vrot.slane %v163, 2
    %v165 = vadd.f32 %v163, %v164
    %v166 = vrot.slane %v165, 1
    %v167 = vadd.f32 %v165, %v166
    %v168 = vsel %vm45, %v152, 0.0
    %v169 = vrot.slane %v168, 4
    %v170 = vadd.f32 %v168, %v169
    %v171 = vrot.slane %v170, 2
    %v172 = vadd.f32 %v170, %v171
    %v173 = vrot.slane %v172, 1
    %v174 = vadd.f32 %v172, %v173
    %v175 = vsel %vm45, %v153, 0.0
    %v176 = vrot.slane %v175, 4
    %v177 = vadd.f32 %v175, %v176
    %v178 = vrot.slane %v177, 2
    %v179 = vadd.f32 %v177, %v178
    %v180 = vrot.slane %v179, 1
    %v181 = vadd.f32 %v179, %v180
    %v182 = vlog2.pop %v100
    %v183 = vmul.f32 %v182, 0.6931472
    %v184 = vlog2.pop %v107
    %v185 = vmul.f32 %v184, 0.6931472
    %v186 = vlog2.pop %v114
    %v187 = vmul.f32 %v186, 0.6931472
    %v188 = vlog2.pop %v121
    %v189 = vmul.f32 %v188, 0.6931472
    %v190 = vsub.f32 %v183, %v160
    %v191 = vsub.f32 %v185, %v167
    %v192 = vsub.f32 %v187, %v174
    %v193 = vsub.f32 %v189, %v181
    %vm194 = vcmask 1040384
    %v195 = vsel %vm194, %v190, 0.0
    %v196 = vsel %vm194, %v191, 0.0
    %v197 = vadd.f32 %v195, %v196
    %v198 = vsel %vm194, %v192, 0.0
    %v199 = vadd.f32 %v197, %v198
    %v200 = vsel %vm194, %v193, 0.0
    %v201 = vadd.f32 %v199, %v200
    %202 = vadd.xlane.f32.xlu0 %v201
    %v203 = vpop.xlane.xlu0 %202
    %v204 = vrot.slane %v203, 4
    %v205 = vadd.f32 %v203, %v204
    %v206 = vrot.slane %v205, 2
    %v207 = vadd.f32 %v205, %v206
    %v208 = vrot.slane %v207, 1
    %v209 = vadd.f32 %v207, %v208
    %s210 = vtos %v209
    %v211 = vstv %s210
    %212 = vst [vmem:[#allocation7] sm:$0xff] %v211
    // Predicated region
    $region18: #{tpu_custom_call.1} parent=1 // pred_check
      _
    $region19: #{tpu_custom_call.1} parent=1 // pred_check_branch
      %214 = sbr.rel (0) target = $region21
    $region20: #{tpu_custom_call.1} parent=1 // pred_region
      %s216 = ssub.s32 128, 128
      %217 = vsyncadd [#allocation4], %s216
      %s219 = sshll.u32 [#allocation7], 4
      %s220 = int_to_ptr.vmem [resolvable:$true] %s219
      %222 = dma.vmem_to_hbm [thread:$0]  %s220, 128, %s2, [#allocation4]
    $region21: #{tpu_custom_call.1} parent=1 // pred_fallthru
      _
    // Predicated region
    $region22: #{tpu_custom_call.1} parent=1 // pred_check
      _
    $region23: #{tpu_custom_call.1} parent=1 // pred_check_branch
      %224 = sbr.rel (0) target = $region25
    $region24: #{tpu_custom_call.1} parent=1 // pred_region
      %225 = dma.done [#allocation4], 128
    $region25: #{tpu_custom_call.1} parent=1 // pred_fallthru
      _
    %226 = vsyncpa [#allocation3], 1
    %227 = vsyncpa [#allocation6], 1
    %228 = vsyncpa [#allocation4], 1

</llo_original>
